<compile_context>
chip_gen: v5e
topology: v5e:2x2
jax: 0.10.0
libtpu: 0.0.40
codegen_flags: <defaults>
</compile_context>

<pallas_src>
import numpy as np
import jax
import jax.numpy as jnp
from jax.experimental import pallas as pl
from jax.experimental.pallas import tpu as pltpu

# ----------------------------------------------------------------------------
# Module configuration (mirrors the PyTorch module wiring)
# ----------------------------------------------------------------------------
CHARS = '!"$%&\'()*+,-./0123456789:;<>?[]abcdefghijklmnopqrstuvwxyz'
VOCAB_SIZE = len(CHARS)                       # build_char_lang() => 57 chars

WORD_VEC_SIZE = 32                            # word_vectors.vector_size
EMBEDDING_SIZE = 32                           # CNNWordFeature.embedding_size (= input_size)
FEATURE_SIZE = 32                             # CNNWordFeature.feature_size  (= input_size)
CHAR_MAX_LENGTH = 16                          # params.CHAR_LENGTH
MAX_SENT_LEN = 16                             # BaseEncoderBiRNN.max_length
HIDDEN_SIZE = 32                              # BaseEncoderBiRNN.hidden_size
LSTM_INPUT = 2 * WORD_VEC_SIZE                # word vector + char CNN feature

C2 = FEATURE_SIZE // 3 + FEATURE_SIZE % 3     # conv2 out channels (12)
C3 = FEATURE_SIZE // 3                        # conv3 out channels (10)
C4 = FEATURE_SIZE // 3                        # conv4 out channels (10)
assert C2 + C3 + C4 == FEATURE_SIZE

N_SHIFT = 4                                   # largest conv kernel height
ROW_GROUPS = CHAR_MAX_LENGTH // N_SHIFT       # 4 lane-dense rows per word
KDIM = N_SHIFT * EMBEDDING_SIZE               # 128 (lane-dense contraction dim)
C_PAD = 128                                   # lane-dense padded channel dim
assert CHAR_MAX_LENGTH % N_SHIFT == 0 and KDIM == 128


def _sigmoid(x):
    return 1.0 / (1.0 + jnp.exp(-x))


# ----------------------------------------------------------------------------
# Kernel 1: batched char-CNN word feature (fused conv2/conv3/conv4 + max-pool)
# ----------------------------------------------------------------------------
def _char_cnn_kernel(a_ref, wa_ref, wb_ref, mask_ref, bias_ref, out_ref):
    M, Q = a_ref.shape                          # (4*block_words, 128)
    Bb, Cp = out_ref.shape                      # (block_words, 128)
    R, P = mask_ref.shape[0], mask_ref.shape[1] # (4, 4)

    A = a_ref[...]                                              # lane-dense rows of 4 chars
    A_pad = jnp.concatenate([A, jnp.zeros((8, Q), jnp.float32)], axis=0)
    A1 = A_pad[1:M + 1, :]                                      # A1[m] = A[m+1]
    # Rows of A1 that cross a word (or block) boundary only ever meet zero
    # weight rows of Wb_r or masked window positions -> harmless.

    pooled = None
    for r in range(R):                          # window phase l = 4p + r
        act = jnp.dot(A, wa_ref[r], preferred_element_type=jnp.float32)
        if r:                                   # Wb_0 == 0, skip its matmul
            act = act + jnp.dot(A1, wb_ref[r], preferred_element_type=jnp.float32)
        # additive validity mask (0 valid / -1e30 invalid), then pool over p
        act = act.reshape(Bb, P, Cp) + mask_ref[r][None]
        m_r = jnp.max(act, axis=1)              # (Bb, Cp)
        pooled = m_r if pooled is None else jnp.maximum(pooled, m_r)

    # bias after max (per-channel constant commutes with max); ReLU after max
    # equals max of ReLU since every real branch has >=13 valid windows.
    out_ref[...] = jnp.maximum(pooled + bias_ref[...], 0.0)


def _fused_cnn_weights(params):
    """Pack conv2/conv3/conv4 (nn.Conv2d OIHW) into phase-shifted fused weights.

    Returns:
      wa, wb : (4, 128, 128) phase-shifted copies of the fused (128,128) weight
      mask   : (4, 4, 128) additive validity mask, mask[r, p, c] for window 4p+r
      bias   : (1, 128) per-channel bias (padded channels stay 0)
    """
    E, L, K = EMBEDDING_SIZE, CHAR_MAX_LENGTH, KDIM
    W = jnp.zeros((K, C_PAD), jnp.float32)
    bias = jnp.zeros((1, C_PAD), jnp.float32)
    nvalid = jnp.full((C_PAD,), L, jnp.int32)   # padded channels: always valid -> 0 after ReLU
    off = 0
    for wk, bk in (("w2", "b2"), ("w3", "b3"), ("w4", "b4")):
        w = params[wk]                          # (C, 1, k, kW)
        c, _, k, kw = w.shape
        # forward() requires embedding width == feature width; guards the latent
        # conv3/conv4 kernel-width quirk of the original module.
        assert kw == E
        W = W.at[: k * kw, off:off + c].set(w.reshape(c, k * kw).T)
        bias = bias.at[0, off:off + c].set(params[bk])
        nvalid = nvalid.at[off:off + c].set(L - k + 1)
        off += c

    wa = jnp.zeros((N_SHIFT, K, C_PAD), jnp.float32)
    wb = jnp.zeros((N_SHIFT, K, C_PAD), jnp.float32)
    for r in range(N_SHIFT):
        sh = r * E
        wa = wa.at[r, sh:, :].set(W[:K - sh, :])
        if sh:
            wb = wb.at[r, :sh, :].set(W[K - sh:, :])

    # mask[r, p, c] = 0 if window l = 4p + r is valid for channel c, else -1e30
    l_idx = (N_SHIFT * jnp.arange(ROW_GROUPS, dtype=jnp.int32)[None, :]
             + jnp.arange(N_SHIFT, dtype=jnp.int32)[:, None])      # (r, p) -> 4p + r
    mask = jnp.where(l_idx[:, :, None] < nvalid[None, None, :],
                     0.0, -1e30).astype(jnp.float32)
    return wa, wb, mask, bias


def char_cnn_features(char_ids, emb_table, cnn_params, block_words=512):
    """char_ids: (B, CHAR_MAX_LENGTH) int32, -1 = padding. Returns (B, FEATURE_SIZE)."""
    B, L = char_ids.shape
    assert L == CHAR_MAX_LENGTH
    wa, wb, mask, bias = _fused_cnn_weights(cnn_params)

    # Embedding gather done by XLA in the wrapper; padded char slots stay zero,
    # matching the torch.zeros(max_length, feature_size) buffer in forward().
    emb = jnp.where((char_ids >= 0)[..., None],
                    emb_table[jnp.clip(char_ids, 0, VOCAB_SIZE - 1)],
                    0.0).astype(jnp.float32)                      # (B, L, E)
    # Row-major free reshape: each word becomes 4 lane-dense rows of 128.
    embA = emb.reshape(B * ROW_GROUPS, KDIM)

    # Block sizing: cap at the requested block, shrink for small batches so the
    # grid has >=2 parallel steps (keeps both v7x TensorCores busy); multiple of 8.
    bw = min(block_words, max(8, ((B + 15) // 16) * 8))
    bw = max(8, (bw // 8) * 8)
    nblk = (B + bw - 1) // bw
    Bp = nblk * bw
    embA = jnp.pad(embA, ((0, (Bp - B) * ROW_GROUPS), (0, 0)))

    out = pl.pallas_call(
        _char_cnn_kernel,
        out_shape=jax.ShapeDtypeStruct((Bp, C_PAD), jnp.float32),
        grid=(nblk,),
        in_specs=[
            pl.BlockSpec((bw * ROW_GROUPS, KDIM), lambda i: (i, 0)),
            pl.BlockSpec((N_SHIFT, KDIM, C_PAD), lambda i: (0, 0, 0)),
            pl.BlockSpec((N_SHIFT, KDIM, C_PAD), lambda i: (0, 0, 0)),
            pl.BlockSpec((N_SHIFT, ROW_GROUPS, C_PAD), lambda i: (0, 0, 0)),
            pl.BlockSpec((1, C_PAD), lambda i: (0, 0)),
        ],
        out_specs=pl.BlockSpec((bw, C_PAD), lambda i: (i, 0)),
        compiler_params=pltpu.CompilerParams(
            dimension_semantics=("parallel",),
            vmem_limit_bytes=32 * 1024 * 1024),
    )(embA, wa, wb, mask, bias)
    return out[:B, :FEATURE_SIZE]


# ----------------------------------------------------------------------------
# Kernel 2: bidirectional LSTM encoder (BaseEncoderBiRNN.forward)
# ----------------------------------------------------------------------------
def _bilstm_kernel(x_ref, wih_f_ref, whh_f_ref, b_f_ref,
                   wih_r_ref, whh_r_ref, b_r_ref,
                   out_ref, hid_ref, cell_ref,
                   fsc_ref, rsc_ref, gxf_ref, gxr_ref):
    T = x_ref.shape[0]
    H = whh_f_ref.shape[0]

    fsc_ref[...] = jnp.zeros(fsc_ref.shape, jnp.float32)
    rsc_ref[...] = jnp.zeros(rsc_ref.shape, jnp.float32)

    # Hoist the input projections (and biases) of BOTH directions out of the
    # recurrent loop: one (T,D)@(D,4H) matmul per direction.
    x = x_ref[...]
    gxf_ref[0:T, :] = (jnp.dot(x, wih_f_ref[...], preferred_element_type=jnp.float32)
                       + b_f_ref[...])
    gxr_ref[0:T, :] = (jnp.dot(x, wih_r_ref[...], preferred_element_type=jnp.float32)
                       + b_r_ref[...])

    whh_f = whh_f_ref[...]
    whh_r = whh_r_ref[...]

    def step(s, carry):
        hf, cf, hr, cr = carry
        # forward direction at time s, reverse direction at time T-1-s
        gf = (jnp.dot(hf, whh_f, preferred_element_type=jnp.float32)
              + gxf_ref[pl.ds(s, 1), :])                          # (1, 4H)
        gr = (jnp.dot(hr, whh_r, preferred_element_type=jnp.float32)
              + gxr_ref[pl.ds(T - 1 - s, 1), :])
        # one sigmoid + one tanh per direction on the full gate vector
        sf, tf_ = _sigmoid(gf), jnp.tanh(gf)
        sr, tr_ = _sigmoid(gr), jnp.tanh(gr)
        i_f, f_f, g_f, o_f = (sf[:, 0:H], sf[:, H:2 * H],
                              tf_[:, 2 * H:3 * H], sf[:, 3 * H:4 * H])
        i_r, f_r, g_r, o_r = (sr[:, 0:H], sr[:, H:2 * H],
                              tr_[:, 2 * H:3 * H], sr[:, 3 * H:4 * H])
        cf = f_f * cf + i_f * g_f
        hf = o_f * jnp.tanh(cf)
        cr = f_r * cr + i_r * g_r
        hr = o_r * jnp.tanh(cr)
        fsc_ref[pl.ds(s, 1), :] = hf
        rsc_ref[pl.ds(T - 1 - s, 1), :] = hr
        return (hf, cf, hr, cr)

    zero = jnp.zeros((1, H), jnp.float32)
    hf, cf, hr, cr = jax.lax.fori_loop(0, T, step, (zero, zero, zero, zero),
                                       unroll=True)

    out_ref[...] = jnp.concatenate([fsc_ref[...], rsc_ref[...]], axis=1)
    hid_ref[...] = jnp.concatenate([hf, hr], axis=1)
    cell_ref[...] = jnp.concatenate([cf, cr], axis=1)


def bilstm_encode(x, lstm_params, max_length=MAX_SENT_LEN):
    """x: (T, D) inputs (T = actual sentence length, un-padded).
    Returns (outputs (max_length, 2H), hidden (1, 2H), cell (1, 2H))."""
    H = HIDDEN_SIZE

    def prep(direction):
        wih = lstm_params[f"w_ih_{direction}"]            # (4H, D) torch layout
        whh = lstm_params[f"w_hh_{direction}"]            # (4H, H)
        b = (lstm_params[f"b_ih_{direction}"]
             + lstm_params[f"b_hh_{direction}"]).reshape(1, -1)
        return wih.T, whh.T, b                            # (D,4H), (H,4H), (1,4H)

    wih_f, whh_f, b_f = prep("fwd")
    wih_r, whh_r, b_r = prep("rev")

    vmem = pl.BlockSpec(memory_space=pltpu.MemorySpace.VMEM)
    outputs, hidden, cell = pl.pallas_call(
        _bilstm_kernel,
        out_shape=(jax.ShapeDtypeStruct((max_length, 2 * H), jnp.float32),
                   jax.ShapeDtypeStruct((1, 2 * H), jnp.float32),
                   jax.ShapeDtypeStruct((1, 2 * H), jnp.float32)),
        in_specs=[vmem] * 7,
        out_specs=(vmem, vmem, vmem),
        scratch_shapes=[pltpu.VMEM((max_length, H), jnp.float32),
                        pltpu.VMEM((max_length, H), jnp.float32),
                        pltpu.VMEM((max_length, 4 * H), jnp.float32),
                        pltpu.VMEM((max_length, 4 * H), jnp.float32)],
    )(x, wih_f, whh_f, b_f, wih_r, whh_r, b_r)
    return outputs, hidden, cell


# ----------------------------------------------------------------------------
# Full module forward (word vectors already looked up host-side, like the
# gensim dict lookup in get_word_vector).
# ----------------------------------------------------------------------------
def prembed_wordchar_birnn_forward(word_vectors, char_ids, emb_table,
                                   cnn_params, lstm_params, block_words=512):
    assert word_vectors.shape[0] == char_ids.shape[0]
    char_feats = char_cnn_features(char_ids, emb_table, cnn_params,
                                   block_words=block_words)        # (T, FEATURE_SIZE)
    x = jnp.concatenate([word_vectors, char_feats], axis=1)        # (T, 2*input_size)
    # Returns (outputs, hidden, cell); torch returns (outputs,(hidden,cell),(hidden,cell))
    # with hidden/cell shaped (1,1,2H) — same values, singleton dim dropped.
    return bilstm_encode(x, lstm_params)


# ----------------------------------------------------------------------------
# Pure-JAX references (independent of the kernels)
# ----------------------------------------------------------------------------
def _reference_char_cnn(char_ids, emb_table, params):
    emb = jnp.where((char_ids >= 0)[..., None],
                    emb_table[jnp.clip(char_ids, 0, VOCAB_SIZE - 1)], 0.0)
    x = emb[:, None, :, :]                                          # (B,1,L,E)

    def branch(w, b):
        y = jax.lax.conv_general_dilated(
            x, w, window_strides=(1, 1), padding="VALID",
            dimension_numbers=("NCHW", "OIHW", "NCHW"),
            precision=jax.lax.Precision.HIGHEST)
        y = jnp.maximum(y + b[None, :, None, None], 0.0)
        return jnp.max(y, axis=(2, 3))                              # (B, C)

    return jnp.concatenate([branch(params["w2"], params["b2"]),
                            branch(params["w3"], params["b3"]),
                            branch(params["w4"], params["b4"])], axis=1)


def _reference_bilstm(x, lstm_params, max_length=MAX_SENT_LEN):
    T, _ = x.shape
    H = HIDDEN_SIZE
    hi = jax.lax.Precision.HIGHEST

    def run(direction, order):
        wih = lstm_params[f"w_ih_{direction}"]
        whh = lstm_params[f"w_hh_{direction}"]
        b = lstm_params[f"b_ih_{direction}"] + lstm_params[f"b_hh_{direction}"]
        h = jnp.zeros((H,), jnp.float32)
        c = jnp.zeros((H,), jnp.float32)
        outs = jnp.zeros((max_length, H), jnp.float32)
        for t in order:
            gates = (jnp.dot(x[t], wih.T, precision=hi)
                     + jnp.dot(h, whh.T, precision=hi) + b)
            i = _sigmoid(gates[0:H])
            f = _sigmoid(gates[H:2 * H])
            g = jnp.tanh(gates[2 * H:3 * H])
            o = _sigmoid(gates[3 * H:4 * H])
            c = f * c + i * g
            h = o * jnp.tanh(c)
            outs = outs.at[t].set(h)
        return outs, h, c

    of, hf, cf = run("fwd", range(T))
    orv, hr, cr = run("rev", range(T - 1, -1, -1))
    outputs = jnp.concatenate([of, orv], axis=1)
    hidden = jnp.concatenate([hf, hr]).reshape(1, -1)
    cell = jnp.concatenate([cf, cr]).reshape(1, -1)
    return outputs, hidden, cell


def _reference_forward(word_vectors, char_ids, emb_table, cnn_params, lstm_params):
    char_feats = _reference_char_cnn(char_ids, emb_table, cnn_params)
    x = jnp.concatenate([word_vectors, char_feats], axis=1)
    return _reference_bilstm(x, lstm_params)


# ----------------------------------------------------------------------------
# Main
# ----------------------------------------------------------------------------
if __name__ == "__main__":
    key = jax.random.PRNGKey(0)
    ks = jax.random.split(key, 20)
    f32 = jnp.float32

    emb_table = jax.random.normal(ks[0], (VOCAB_SIZE, EMBEDDING_SIZE), f32) * 0.1
    cnn_params = {
        "w2": jax.random.normal(ks[1], (C2, 1, 2, EMBEDDING_SIZE), f32) * 0.1,
        "b2": jax.random.normal(ks[2], (C2,), f32) * 0.1,
        "w3": jax.random.normal(ks[3], (C3, 1, 3, EMBEDDING_SIZE), f32) * 0.1,
        "b3": jax.random.normal(ks[4], (C3,), f32) * 0.1,
        "w4": jax.random.normal(ks[5], (C4, 1, 4, EMBEDDING_SIZE), f32) * 0.1,
        "b4": jax.random.normal(ks[6], (C4,), f32) * 0.1,
    }
    H4, D = 4 * HIDDEN_SIZE, LSTM_INPUT
    lstm_params = {
        "w_ih_fwd": jax.random.normal(ks[7], (H4, D), f32) * 0.1,
        "w_hh_fwd": jax.random.normal(ks[8], (H4, HIDDEN_SIZE), f32) * 0.1,
        "b_ih_fwd": jax.random.normal(ks[9], (H4,), f32) * 0.1,
        "b_hh_fwd": jax.random.normal(ks[10], (H4,), f32) * 0.1,
        "w_ih_rev": jax.random.normal(ks[11], (H4, D), f32) * 0.1,
        "w_hh_rev": jax.random.normal(ks[12], (H4, HIDDEN_SIZE), f32) * 0.1,
        "b_ih_rev": jax.random.normal(ks[13], (H4,), f32) * 0.1,
        "b_hh_rev": jax.random.normal(ks[14], (H4,), f32) * 0.1,
    }

    # Sentence of T words: pretrained word vectors + per-word char ids (-1 pad).
    T = 8
    word_vectors = jax.random.normal(ks[15], (T, WORD_VEC_SIZE), f32) * 0.5
    lens = jax.random.randint(ks[16], (T,), 2, CHAR_MAX_LENGTH + 1)
    chars = jax.random.randint(ks[17], (T, CHAR_MAX_LENGTH), 0, VOCAB_SIZE, dtype=jnp.int32)
    pos = jnp.arange(CHAR_MAX_LENGTH)[None, :]
    char_ids = jnp.where(pos < lens[:, None], chars, -1).astype(jnp.int32)

    outputs, hidden, cell = prembed_wordchar_birnn_forward(
        word_vectors, char_ids, emb_table, cnn_params, lstm_params)
    outputs, hidden, cell = jax.block_until_ready((outputs, hidden, cell))

    r_out, r_hid, r_cell = _reference_forward(
        word_vectors, char_ids, emb_table, cnn_params, lstm_params)
    np.testing.assert_allclose(np.asarray(outputs), np.asarray(r_out), rtol=1e-5, atol=2e-5)
    np.testing.assert_allclose(np.asarray(hidden), np.asarray(r_hid), rtol=1e-5, atol=2e-5)
    np.testing.assert_allclose(np.asarray(cell), np.asarray(r_cell), rtol=1e-5, atol=2e-5)
    assert outputs.shape == (MAX_SENT_LEN, 2 * HIDDEN_SIZE)
    assert hidden.shape == (1, 2 * HIDDEN_SIZE) and cell.shape == (1, 2 * HIDDEN_SIZE)

    # Extra check: the batched char-CNN kernel over multiple grid steps.
    B_big = 600
    lens_b = jax.random.randint(ks[18], (B_big,), 1, CHAR_MAX_LENGTH + 1)
    chars_b = jax.random.randint(ks[19], (B_big, CHAR_MAX_LENGTH), 0, VOCAB_SIZE, dtype=jnp.int32)
    ids_b = jnp.where(pos < lens_b[:, None], chars_b, -1).astype(jnp.int32)
    feats = jax.block_until_ready(
        char_cnn_features(ids_b, emb_table, cnn_params, block_words=256))
    ref_feats = _reference_char_cnn(ids_b, emb_table, cnn_params)
    np.testing.assert_allclose(np.asarray(feats), np.asarray(ref_feats), rtol=1e-5, atol=2e-5)
    assert feats.shape == (B_big, FEATURE_SIZE)

    print("KERNEL_OK")
</pallas_src>

<mosaic_0001>
module attributes {stable_mosaic.version = 11 : i64} {
  func.func @_char_cnn_kernel(%arg0: i32, %arg1: memref<32x128xf32, #tpu.memory_space<vmem>>, %arg2: memref<4x128x128xf32, #tpu.memory_space<vmem>>, %arg3: memref<4x128x128xf32, #tpu.memory_space<vmem>>, %arg4: memref<4x4x128xf32, #tpu.memory_space<vmem>>, %arg5: memref<1x128xf32, #tpu.memory_space<vmem>>, %arg6: memref<8x128xf32, #tpu.memory_space<vmem>>) attributes {dimension_semantics = [#tpu.dimension_semantics<parallel>], iteration_bounds = array<i64: 1>, scalar_prefetch = 0 : i64, scratch_operands = 0 : i64, tpu.core_type = #tpu.core_type<tc>, window_params = [{transform_indices = @transform_0, window_bounds = array<i64: 32, 128>}, {pipeline_mode = #tpu.pipeline_mode<synchronous>, transform_indices = @transform_1, window_bounds = array<i64: 4, 128, 128>}, {pipeline_mode = #tpu.pipeline_mode<synchronous>, transform_indices = @transform_2, window_bounds = array<i64: 4, 128, 128>}, {pipeline_mode = #tpu.pipeline_mode<synchronous>, transform_indices = @transform_3, window_bounds = array<i64: 4, 4, 128>}, {pipeline_mode = #tpu.pipeline_mode<synchronous>, transform_indices = @transform_4, window_bounds = array<i64: 1, 128>}, {transform_indices = @transform_5, window_bounds = array<i64: 8, 128>}]} {
    %c0 = arith.constant 0 : index
    %c0_0 = arith.constant 0 : index
    %0 = vector.load %arg1[%c0, %c0_0] : memref<32x128xf32, #tpu.memory_space<vmem>>, vector<32x128xf32>
    %cst = arith.constant 0.000000e+00 : f32
    %1 = vector.broadcast %cst : f32 to vector<8x128xf32>
    %2 = tpu.concatenate %0, %1 in 0 : vector<32x128xf32>, vector<8x128xf32> -> vector<40x128xf32>
    %3 = vector.extract_strided_slice %2 {offsets = [1, 0], sizes = [32, 128], strides = [1, 1]} : vector<40x128xf32> to vector<32x128xf32>
    %c0_1 = arith.constant 0 : index
    %c0_2 = arith.constant 0 : index
    %c0_3 = arith.constant 0 : index
    %4 = vector.load %arg2[%c0_1, %c0_2, %c0_3] : memref<4x128x128xf32, #tpu.memory_space<vmem>>, vector<1x128x128xf32>
    %5 = vector.shape_cast %4 : vector<1x128x128xf32> to vector<128x128xf32>
    %cst_4 = arith.constant dense<0.000000e+00> : vector<32x128xf32>
    %6 = tpu.matmul %0, %5, %cst_4 {dimension_numbers = #tpu.dot_dimension_numbers<[1], [0], [0], [1], [0, 0, 1, 1], [], []>} : vector<32x128xf32>, vector<128x128xf32>, vector<32x128xf32> -> vector<32x128xf32>
    %7 = vector.shape_cast %6 : vector<32x128xf32> to vector<8x4x128xf32>
    %c0_5 = arith.constant 0 : index
    %c0_6 = arith.constant 0 : index
    %c0_7 = arith.constant 0 : index
    %8 = vector.load %arg4[%c0_5, %c0_6, %c0_7] : memref<4x4x128xf32, #tpu.memory_space<vmem>>, vector<1x4x128xf32>
    %9 = vector.shape_cast %8 : vector<1x4x128xf32> to vector<4x128xf32>
    %10 = vector.shape_cast %9 : vector<4x128xf32> to vector<1x4x128xf32>
    %11 = vector.broadcast %10 : vector<1x4x128xf32> to vector<8x4x128xf32>
    %12 = arith.addf %7, %11 : vector<8x4x128xf32>
    %cst_8 = arith.constant dense<0xFF800000> : vector<8x128xf32>
    %13 = vector.multi_reduction <maximumf>, %12, %cst_8 [1] : vector<8x4x128xf32> to vector<8x128xf32>
    %c1 = arith.constant 1 : index
    %c0_9 = arith.constant 0 : index
    %c0_10 = arith.constant 0 : index
    %14 = vector.load %arg2[%c1, %c0_9, %c0_10] : memref<4x128x128xf32, #tpu.memory_space<vmem>>, vector<1x128x128xf32>
    %15 = vector.shape_cast %14 : vector<1x128x128xf32> to vector<128x128xf32>
    %cst_11 = arith.constant dense<0.000000e+00> : vector<32x128xf32>
    %16 = tpu.matmul %0, %15, %cst_11 {dimension_numbers = #tpu.dot_dimension_numbers<[1], [0], [0], [1], [0, 0, 1, 1], [], []>} : vector<32x128xf32>, vector<128x128xf32>, vector<32x128xf32> -> vector<32x128xf32>
    %c1_12 = arith.constant 1 : index
    %c0_13 = arith.constant 0 : index
    %c0_14 = arith.constant 0 : index
    %17 = vector.load %arg3[%c1_12, %c0_13, %c0_14] : memref<4x128x128xf32, #tpu.memory_space<vmem>>, vector<1x128x128xf32>
    %18 = vector.shape_cast %17 : vector<1x128x128xf32> to vector<128x128xf32>
    %cst_15 = arith.constant dense<0.000000e+00> : vector<32x128xf32>
    %19 = tpu.matmul %3, %18, %cst_15 {dimension_numbers = #tpu.dot_dimension_numbers<[1], [0], [0], [1], [0, 0, 1, 1], [], []>} : vector<32x128xf32>, vector<128x128xf32>, vector<32x128xf32> -> vector<32x128xf32>
    %20 = arith.addf %16, %19 : vector<32x128xf32>
    %21 = vector.shape_cast %20 : vector<32x128xf32> to vector<8x4x128xf32>
    %c1_16 = arith.constant 1 : index
    %c0_17 = arith.constant 0 : index
    %c0_18 = arith.constant 0 : index
    %22 = vector.load %arg4[%c1_16, %c0_17, %c0_18] : memref<4x4x128xf32, #tpu.memory_space<vmem>>, vector<1x4x128xf32>
    %23 = vector.shape_cast %22 : vector<1x4x128xf32> to vector<4x128xf32>
    %24 = vector.shape_cast %23 : vector<4x128xf32> to vector<1x4x128xf32>
    %25 = vector.broadcast %24 : vector<1x4x128xf32> to vector<8x4x128xf32>
    %26 = arith.addf %21, %25 : vector<8x4x128xf32>
    %cst_19 = arith.constant dense<0xFF800000> : vector<8x128xf32>
    %27 = vector.multi_reduction <maximumf>, %26, %cst_19 [1] : vector<8x4x128xf32> to vector<8x128xf32>
    %28 = arith.maximumf %13, %27 : vector<8x128xf32>
    %c2 = arith.constant 2 : index
    %c0_20 = arith.constant 0 : index
    %c0_21 = arith.constant 0 : index
    %29 = vector.load %arg2[%c2, %c0_20, %c0_21] : memref<4x128x128xf32, #tpu.memory_space<vmem>>, vector<1x128x128xf32>
    %30 = vector.shape_cast %29 : vector<1x128x128xf32> to vector<128x128xf32>
    %cst_22 = arith.constant dense<0.000000e+00> : vector<32x128xf32>
    %31 = tpu.matmul %0, %30, %cst_22 {dimension_numbers = #tpu.dot_dimension_numbers<[1], [0], [0], [1], [0, 0, 1, 1], [], []>} : vector<32x128xf32>, vector<128x128xf32>, vector<32x128xf32> -> vector<32x128xf32>
    %c2_23 = arith.constant 2 : index
    %c0_24 = arith.constant 0 : index
    %c0_25 = arith.constant 0 : index
    %32 = vector.load %arg3[%c2_23, %c0_24, %c0_25] : memref<4x128x128xf32, #tpu.memory_space<vmem>>, vector<1x128x128xf32>
    %33 = vector.shape_cast %32 : vector<1x128x128xf32> to vector<128x128xf32>
    %cst_26 = arith.constant dense<0.000000e+00> : vector<32x128xf32>
    %34 = tpu.matmul %3, %33, %cst_26 {dimension_numbers = #tpu.dot_dimension_numbers<[1], [0], [0], [1], [0, 0, 1, 1], [], []>} : vector<32x128xf32>, vector<128x128xf32>, vector<32x128xf32> -> vector<32x128xf32>
    %35 = arith.addf %31, %34 : vector<32x128xf32>
    %36 = vector.shape_cast %35 : vector<32x128xf32> to vector<8x4x128xf32>
    %c2_27 = arith.constant 2 : index
    %c0_28 = arith.constant 0 : index
    %c0_29 = arith.constant 0 : index
    %37 = vector.load %arg4[%c2_27, %c0_28, %c0_29] : memref<4x4x128xf32, #tpu.memory_space<vmem>>, vector<1x4x128xf32>
    %38 = vector.shape_cast %37 : vector<1x4x128xf32> to vector<4x128xf32>
    %39 = vector.shape_cast %38 : vector<4x128xf32> to vector<1x4x128xf32>
    %40 = vector.broadcast %39 : vector<1x4x128xf32> to vector<8x4x128xf32>
    %41 = arith.addf %36, %40 : vector<8x4x128xf32>
    %cst_30 = arith.constant dense<0xFF800000> : vector<8x128xf32>
    %42 = vector.multi_reduction <maximumf>, %41, %cst_30 [1] : vector<8x4x128xf32> to vector<8x128xf32>
    %43 = arith.maximumf %28, %42 : vector<8x128xf32>
    %c3 = arith.constant 3 : index
    %c0_31 = arith.constant 0 : index
    %c0_32 = arith.constant 0 : index
    %44 = vector.load %arg2[%c3, %c0_31, %c0_32] : memref<4x128x128xf32, #tpu.memory_space<vmem>>, vector<1x128x128xf32>
    %45 = vector.shape_cast %44 : vector<1x128x128xf32> to vector<128x128xf32>
    %cst_33 = arith.constant dense<0.000000e+00> : vector<32x128xf32>
    %46 = tpu.matmul %0, %45, %cst_33 {dimension_numbers = #tpu.dot_dimension_numbers<[1], [0], [0], [1], [0, 0, 1, 1], [], []>} : vector<32x128xf32>, vector<128x128xf32>, vector<32x128xf32> -> vector<32x128xf32>
    %c3_34 = arith.constant 3 : index
    %c0_35 = arith.constant 0 : index
    %c0_36 = arith.constant 0 : index
    %47 = vector.load %arg3[%c3_34, %c0_35, %c0_36] : memref<4x128x128xf32, #tpu.memory_space<vmem>>, vector<1x128x128xf32>
    %48 = vector.shape_cast %47 : vector<1x128x128xf32> to vector<128x128xf32>
    %cst_37 = arith.constant dense<0.000000e+00> : vector<32x128xf32>
    %49 = tpu.matmul %3, %48, %cst_37 {dimension_numbers = #tpu.dot_dimension_numbers<[1], [0], [0], [1], [0, 0, 1, 1], [], []>} : vector<32x128xf32>, vector<128x128xf32>, vector<32x128xf32> -> vector<32x128xf32>
    %50 = arith.addf %46, %49 : vector<32x128xf32>
    %51 = vector.shape_cast %50 : vector<32x128xf32> to vector<8x4x128xf32>
    %c3_38 = arith.constant 3 : index
    %c0_39 = arith.constant 0 : index
    %c0_40 = arith.constant 0 : index
    %52 = vector.load %arg4[%c3_38, %c0_39, %c0_40] : memref<4x4x128xf32, #tpu.memory_space<vmem>>, vector<1x4x128xf32>
    %53 = vector.shape_cast %52 : vector<1x4x128xf32> to vector<4x128xf32>
    %54 = vector.shape_cast %53 : vector<4x128xf32> to vector<1x4x128xf32>
    %55 = vector.broadcast %54 : vector<1x4x128xf32> to vector<8x4x128xf32>
    %56 = arith.addf %51, %55 : vector<8x4x128xf32>
    %cst_41 = arith.constant dense<0xFF800000> : vector<8x128xf32>
    %57 = vector.multi_reduction <maximumf>, %56, %cst_41 [1] : vector<8x4x128xf32> to vector<8x128xf32>
    %58 = arith.maximumf %43, %57 : vector<8x128xf32>
    %c0_42 = arith.constant 0 : index
    %c0_43 = arith.constant 0 : index
    %59 = vector.load %arg5[%c0_42, %c0_43] : memref<1x128xf32, #tpu.memory_space<vmem>>, vector<1x128xf32>
    %60 = vector.broadcast %59 : vector<1x128xf32> to vector<8x128xf32>
    %61 = arith.addf %58, %60 : vector<8x128xf32>
    %cst_44 = arith.constant 0.000000e+00 : f32
    %62 = vector.broadcast %cst_44 : f32 to vector<8x128xf32>
    %63 = arith.maximumf %61, %62 : vector<8x128xf32>
    %c0_45 = arith.constant 0 : index
    %c0_46 = arith.constant 0 : index
    %64 = vector.load %arg6[%c0_45, %c0_46] : memref<8x128xf32, #tpu.memory_space<vmem>>, vector<8x128xf32>
    tpu.vector_store %arg6[%c0_45, %c0_46], %63 {strides = array<i32>} : memref<8x128xf32, #tpu.memory_space<vmem>>, vector<8x128xf32>,
    return
  }
  func.func @transform_0(%arg0: i32) -> (i32, i32) {
    %c0_i32 = arith.constant 0 : i32
    %c0_i32_0 = arith.constant 0 : i32
    return %arg0, %c0_i32 : i32, i32
  }
  func.func @transform_1(%arg0: i32) -> (i32, i32, i32) {
    %c0_i32 = arith.constant 0 : i32
    %c0_i32_0 = arith.constant 0 : i32
    %c0_i32_1 = arith.constant 0 : i32
    %c0_i32_2 = arith.constant 0 : i32
    return %c0_i32, %c0_i32_0, %c0_i32_1 : i32, i32, i32
  }
  func.func @transform_2(%arg0: i32) -> (i32, i32, i32) {
    %c0_i32 = arith.constant 0 : i32
    %c0_i32_0 = arith.constant 0 : i32
    %c0_i32_1 = arith.constant 0 : i32
    %c0_i32_2 = arith.constant 0 : i32
    return %c0_i32, %c0_i32_0, %c0_i32_1 : i32, i32, i32
  }
  func.func @transform_3(%arg0: i32) -> (i32, i32, i32) {
    %c0_i32 = arith.constant 0 : i32
    %c0_i32_0 = arith.constant 0 : i32
    %c0_i32_1 = arith.constant 0 : i32
    %c0_i32_2 = arith.constant 0 : i32
    return %c0_i32, %c0_i32_0, %c0_i32_1 : i32, i32, i32
  }
  func.func @transform_4(%arg0: i32) -> (i32, i32) {
    %c0_i32 = arith.constant 0 : i32
    %c0_i32_0 = arith.constant 0 : i32
    %c0_i32_1 = arith.constant 0 : i32
    return %c0_i32, %c0_i32_0 : i32, i32
  }
  func.func @transform_5(%arg0: i32) -> (i32, i32) {
    %c0_i32 = arith.constant 0 : i32
    %c0_i32_0 = arith.constant 0 : i32
    return %arg0, %c0_i32 : i32, i32
  }
}

</mosaic_0001>

<llo_original>
// kernel: tpu_custom_call.1
$region0: #{tpu_custom_call.1}
  #allocation0 [shape = 'u32[]', space=smem, size = 0x4, offset = 0x4, fixed_abs, tag = 'smem constant byte address 0x4 - core index']
  #allocation1 [shape = 'u32[72,128]{1,0:T(1,128)}', space=vmem, size = 0x9000, scoped, tag = 'internal scratch']
  %s0 = inlined_call_operand.hbm [shape: f32[32,128], index: 0, kind: input, shape index: {}]
  %s1 = inlined_call_operand.hbm [shape: f32[4,128,128], index: 1, kind: input, shape index: {}]
  %s2 = inlined_call_operand.hbm [shape: f32[4,128,128], index: 2, kind: input, shape index: {}]
  %s3 = inlined_call_operand.hbm [shape: f32[4,4,128], index: 3, kind: input, shape index: {}]
  %s4 = inlined_call_operand.vmem [shape: f32[1,128], index: 4, kind: input, shape index: {}]
  %s5 = inlined_call_operand.hbm [shape: f32[8,128], index: 5, kind: output, shape index: {}]
  %s6 = sld [smem:[#allocation0]]
  $region46: #{tpu_custom_call.1} parent=0
    _
  %s8 = ssub.s32 1, %s6
  %s9 = scalar_select 0, %s8, %s6
  $region1: #{tpu_custom_call.1} parent=0
    #allocation2 [shape = 'u8[16384]{0}', space=vmem, size = 0x4000, scoped, tag = 'input window, operand 0, single buffered']
    #allocation3 [shape = 's32[1]{0}', space=sflag, size = 0x4, scoped, tag = 'scoped memory for tpu_custom_call.1']
    #allocation4 [shape = 's32[1]{0}', space=sflag, size = 0x4, scoped, tag = 'scoped memory for tpu_custom_call.1']
    #allocation5 [shape = 'u8[262144]{0}', space=vmem, size = 0x40000, scoped, tag = 'input window, operand 1, single buffered']
    #allocation6 [shape = 's32[1]{0}', space=sflag, size = 0x4, scoped, tag = 'scoped memory for tpu_custom_call.1']
    #allocation7 [shape = 'u8[262144]{0}', space=vmem, size = 0x40000, scoped, tag = 'input window, operand 2, single buffered']
    #allocation8 [shape = 'u8[8192]{0}', space=vmem, size = 0x2000, scoped, tag = 'input window, operand 3, single buffered']
    #allocation9 [shape = 's32[1]{0}', space=sflag, size = 0x4, scoped, tag = 'scoped memory for tpu_custom_call.1']
    #allocation10 [shape = 'u8[4096]{0}', space=vmem, size = 0x1000, scoped, tag = 'output window, operand 0, single buffered']
    %10 = vsyncpa [#allocation3], 0
    %11 = vsyncpa [#allocation6], 0
    %12 = vsyncpa [#allocation9], 0
    %13 = vsyncpa [#allocation4], 0
    // Predicated region
    $region2: #{tpu_custom_call.1} parent=1 // pred_check
      _
    $region3: #{tpu_custom_call.1} parent=1 // pred_check_branch
      %15 = sbr.rel (0) target = $region5
    $region4: #{tpu_custom_call.1} parent=1 // pred_region
      %17 = vsyncadd [#allocation3], 0
      %s18 = sshll.u32 %s0, 4
      %s19 = int_to_ptr.hbm [resolvable:$true] %s18
      %s20 = sshll.u32 [#allocation2], 4
      %s21 = int_to_ptr.vmem [resolvable:$true] %s20
      %26 = dma.hbm_to_vmem [thread:$0]  %s19, 512, %s21, [#allocation3], 128, 128, 8
    $region5: #{tpu_custom_call.1} parent=1 // pred_fallthru
      _
    // Predicated region
    $region6: #{tpu_custom_call.1} parent=1 // pred_check
      _
    $region7: #{tpu_custom_call.1} parent=1 // pred_check_branch
      %28 = sbr.rel (0) target = $region9
    $region8: #{tpu_custom_call.1} parent=1 // pred_region
      %30 = vsyncadd [#allocation6], 0
      %s31 = sshll.u32 %s1, 4
      %s32 = int_to_ptr.hbm [resolvable:$true] %s31
      %s33 = sshll.u32 [#allocation5], 4
      %s34 = int_to_ptr.vmem [resolvable:$true] %s33
      %39 = dma.hbm_to_vmem [thread:$0]  %s32, 8192, %s34, [#allocation6], 128, 128, 8
    $region9: #{tpu_custom_call.1} parent=1 // pred_fallthru
      _
    // Predicated region
    $region10: #{tpu_custom_call.1} parent=1 // pred_check
      _
    $region11: #{tpu_custom_call.1} parent=1 // pred_check_branch
      %41 = sbr.rel (0) target = $region13
    $region12: #{tpu_custom_call.1} parent=1 // pred_region
      %43 = vsyncadd [#allocation6], 0
      %s44 = sshll.u32 %s2, 4
      %s45 = int_to_ptr.hbm [resolvable:$true] %s44
      %s46 = sshll.u32 [#allocation7], 4
      %s47 = int_to_ptr.vmem [resolvable:$true] %s46
      %52 = dma.hbm_to_vmem [thread:$0]  %s45, 8192, %s47, [#allocation6], 128, 128, 8
    $region13: #{tpu_custom_call.1} parent=1 // pred_fallthru
      _
    // Predicated region
    $region14: #{tpu_custom_call.1} parent=1 // pred_check
      _
    $region15: #{tpu_custom_call.1} parent=1 // pred_check_branch
      %54 = sbr.rel (0) target = $region17
    $region16: #{tpu_custom_call.1} parent=1 // pred_region
      %56 = vsyncadd [#allocation9], 0
      %s57 = sshll.u32 %s3, 4
      %s58 = int_to_ptr.hbm [resolvable:$true] %s57
      %s59 = sshll.u32 [#allocation8], 4
      %s60 = int_to_ptr.vmem [resolvable:$true] %s59
      %65 = dma.hbm_to_vmem [thread:$0]  %s58, 256, %s60, [#allocation9], 64, 64, 4
    $region17: #{tpu_custom_call.1} parent=1 // pred_fallthru
      _
    // Predicated region
    $region18: #{tpu_custom_call.1} parent=1 // pred_check
      _
    $region19: #{tpu_custom_call.1} parent=1 // pred_check_branch
      %67 = sbr.rel (0) target = $region21
    $region20: #{tpu_custom_call.1} parent=1 // pred_region
      _
    $region21: #{tpu_custom_call.1} parent=1 // pred_fallthru
      _
    // Predicated region
    $region22: #{tpu_custom_call.1} parent=1 // pred_check
      _
    $region23: #{tpu_custom_call.1} parent=1 // pred_check_branch
      %69 = sbr.rel (0) target = $region25
    $region24: #{tpu_custom_call.1} parent=1 // pred_region
      %71 = dma.done [#allocation3], 512
    $region25: #{tpu_custom_call.1} parent=1 // pred_fallthru
      _
    // Predicated region
    $region26: #{tpu_custom_call.1} parent=1 // pred_check
      _
    $region27: #{tpu_custom_call.1} parent=1 // pred_check_branch
      %73 = sbr.rel (0) target = $region29
    $region28: #{tpu_custom_call.1} parent=1 // pred_region
      %75 = dma.done [#allocation6], 8192
    $region29: #{tpu_custom_call.1} parent=1 // pred_fallthru
      _
    // Predicated region
    $region30: #{tpu_custom_call.1} parent=1 // pred_check
      _
    $region31: #{tpu_custom_call.1} parent=1 // pred_check_branch
      %77 = sbr.rel (0) target = $region33
    $region32: #{tpu_custom_call.1} parent=1 // pred_region
      %79 = dma.done [#allocation6], 8192
    $region33: #{tpu_custom_call.1} parent=1 // pred_fallthru
      _
    // Predicated region
    $region34: #{tpu_custom_call.1} parent=1 // pred_check
      _
    $region35: #{tpu_custom_call.1} parent=1 // pred_check_branch
      %81 = sbr.rel (0) target = $region37
    $region36: #{tpu_custom_call.1} parent=1 // pred_region
      %83 = dma.done [#allocation9], 256
    $region37: #{tpu_custom_call.1} parent=1 // pred_fallthru
      _
    %v84 = vld [vmem:[#allocation2] sm:$0xff]
    %v85 = vld [vmem:[#allocation2 + $0x8] sm:$0xff]
    %v86 = vld [vmem:[#allocation2 + $0x10] sm:$0xff]
    %v87 = vld [vmem:[#allocation2 + $0x18] sm:$0xff]
    %v88 = vld [vmem:[#allocation5] sm:$0xff]
    %v89 = vld [vmem:[#allocation5 + $0x8] sm:$0xff]
    %v90 = vld [vmem:[#allocation5 + $0x10] sm:$0xff]
    %v91 = vld [vmem:[#allocation5 + $0x18] sm:$0xff]
    %v92 = vld [vmem:[#allocation5 + $0x20] sm:$0xff]
    %v93 = vld [vmem:[#allocation5 + $0x28] sm:$0xff]
    %v94 = vld [vmem:[#allocation5 + $0x30] sm:$0xff]
    %v95 = vld [vmem:[#allocation5 + $0x38] sm:$0xff]
    %v96 = vld [vmem:[#allocation5 + $0x40] sm:$0xff]
    %v97 = vld [vmem:[#allocation5 + $0x48] sm:$0xff]
    %v98 = vld [vmem:[#allocation5 + $0x50] sm:$0xff]
    %v99 = vld [vmem:[#allocation5 + $0x58] sm:$0xff]
    %v100 = vld [vmem:[#allocation5 + $0x60] sm:$0xff]
    %v101 = vld [vmem:[#allocation5 + $0x68] sm:$0xff]
    %v102 = vld [vmem:[#allocation5 + $0x70] sm:$0xff]
    %v103 = vld [vmem:[#allocation5 + $0x78] sm:$0xff]
    %104 = vmatpush.msra.mxu0 %v103
    %105 = vmatpush.msra.mxu0 %v102
    %106 = vmatpush.msra.mxu0 %v101
    %107 = vmatpush.msra.mxu0 %v100
    %108 = vmatpush.msra.mxu0 %v99
    %109 = vmatpush.msra.mxu0 %v98
    %110 = vmatpush.msra.mxu0 %v97
    %111 = vmatpush.msra.mxu0 %v96
    %112 = vmatpush.msra.mxu0 %v95
    %113 = vmatpush.msra.mxu0 %v94
    %114 = vmatpush.msra.mxu0 %v93
    %115 = vmatpush.msra.mxu0 %v92
    %116 = vmatpush.msra.mxu0 %v91
    %117 = vmatpush.msra.mxu0 %v90
    %118 = vmatpush.msra.mxu0 %v89
    %119 = vmatpush.msra.mxu0 %v88
    %120 = vmatmul.f32.gmra.mxu0 %v84
    %v121 = vpop.f32.mrf.mxu0
    %v122 = vadd.f32 0.0, %v121
    %123 = vmatmul.f32.gmra.mxu0 %v85
    %v124 = vpop.f32.mrf.mxu0
    %v125 = vadd.f32 0.0, %v124
    %126 = vmatmul.f32.gmra.mxu0 %v86
    %v127 = vpop.f32.mrf.mxu0
    %v128 = vadd.f32 0.0, %v127
    %129 = vmatmul.f32.gmra.mxu0 %v87
    %v130 = vpop.f32.mrf.mxu0
    %v131 = vadd.f32 0.0, %v130
    %132 = vdwg.mxu0
    %v137 = vrot.slane %v122, 4
    %v138 = vrot.slane %v125, 4
    %v139 = vrot.slane %v128, 4
    %v140 = vrot.slane %v131, 4
    %v145 = vld [vmem:[#allocation8] sm:$0xf]
    %v146 = vadd.f32 %v122, %v145
    %v147 = vadd.f32 %v137, %v145
    %v148 = vadd.f32 %v125, %v145
    %v149 = vadd.f32 %v138, %v145
    %v150 = vadd.f32 %v128, %v145
    %v151 = vadd.f32 %v139, %v145
    %v152 = vadd.f32 %v131, %v145
    %v153 = vadd.f32 %v140, %v145
    %vm154 = vcmask 1043456
    %v155 = vsel %vm154, %v146, -inf
    %v156 = vrot.slane %v155, 4
    %v157 = vmax.f32 %v155, %v156
    %v158 = vrot.slane %v157, 2
    %v159 = vmax.f32 %v157, %v158
    %v160 = vrot.slane %v159, 1
    %v161 = vmax.f32 %v159, %v160
    %v162 = vsel %vm154, %v147, -inf
    %v163 = vrot.slane %v162, 4
    %v164 = vmax.f32 %v162, %v163
    %v165 = vrot.slane %v164, 2
    %v166 = vmax.f32 %v164, %v165
    %v167 = vrot.slane %v166, 1
    %v168 = vmax.f32 %v166, %v167
    %v169 = vsel %vm154, %v148, -inf
    %v170 = vrot.slane %v169, 4
    %v171 = vmax.f32 %v169, %v170
    %v172 = vrot.slane %v171, 2
    %v173 = vmax.f32 %v171, %v172
    %v174 = vrot.slane %v173, 1
    %v175 = vmax.f32 %v173, %v174
    %v176 = vsel %vm154, %v149, -inf
    %v177 = vrot.slane %v176, 4
    %v178 = vmax.f32 %v176, %v177
    %v179 = vrot.slane %v178, 2
    %v180 = vmax.f32 %v178, %v179
    %v181 = vrot.slane %v180, 1
    %v182 = vmax.f32 %v180, %v181
    %v183 = vsel %vm154, %v150, -inf
    %v184 = vrot.slane %v183, 4
    %v185 = vmax.f32 %v183, %v184
    %v186 = vrot.slane %v185, 2
    %v187 = vmax.f32 %v185, %v186
    %v188 = vrot.slane %v187, 1
    %v189 = vmax.f32 %v187, %v188
    %v190 = vsel %vm154, %v151, -inf
    %v191 = vrot.slane %v190, 4
    %v192 = vmax.f32 %v190, %v191
    %v193 = vrot.slane %v192, 2
    %v194 = vmax.f32 %v192, %v193
    %v195 = vrot.slane %v194, 1
    %v196 = vmax.f32 %v194, %v195
    %v197 = vsel %vm154, %v152, -inf
    %v198 = vrot.slane %v197, 4
    %v199 = vmax.f32 %v197, %v198
    %v200 = vrot.slane %v199, 2
    %v201 = vmax.f32 %v199, %v200
    %v202 = vrot.slane %v201, 1
    %v203 = vmax.f32 %v201, %v202
    %v204 = vsel %vm154, %v153, -inf
    %v205 = vrot.slane %v204, 4
    %v206 = vmax.f32 %v204, %v205
    %v207 = vrot.slane %v206, 2
    %v208 = vmax.f32 %v206, %v207
    %v209 = vrot.slane %v208, 1
    %v210 = vmax.f32 %v208, %v209
    %s211 = scalar_lea.vmem [#allocation5], 128
    %v212 = vld [vmem:[%s211] sm:$0xff]
    %v213 = vld [vmem:[%s211 + $0x8] sm:$0xff]
    %v214 = vld [vmem:[%s211 + $0x10] sm:$0xff]
    %v215 = vld [vmem:[%s211 + $0x18] sm:$0xff]
    %v216 = vld [vmem:[%s211 + $0x20] sm:$0xff]
    %v217 = vld [vmem:[%s211 + $0x28] sm:$0xff]
    %v218 = vld [vmem:[%s211 + $0x30] sm:$0xff]
    %v219 = vld [vmem:[%s211 + $0x38] sm:$0xff]
    %v220 = vld [vmem:[%s211 + $0x40] sm:$0xff]
    %v221 = vld [vmem:[%s211 + $0x48] sm:$0xff]
    %v222 = vld [vmem:[%s211 + $0x50] sm:$0xff]
    %v223 = vld [vmem:[%s211 + $0x58] sm:$0xff]
    %v224 = vld [vmem:[%s211 + $0x60] sm:$0xff]
    %v225 = vld [vmem:[%s211 + $0x68] sm:$0xff]
    %v226 = vld [vmem:[%s211 + $0x70] sm:$0xff]
    %v227 = vld [vmem:[%s211 + $0x78] sm:$0xff]
    %s228 = scalar_lea.vmem [#allocation7], 128
    %v229 = vld [vmem:[%s228] sm:$0xff]
    %v230 = vld [vmem:[%s228 + $0x8] sm:$0xff]
    %v231 = vld [vmem:[%s228 + $0x10] sm:$0xff]
    %v232 = vld [vmem:[%s228 + $0x18] sm:$0xff]
    %v233 = vld [vmem:[%s228 + $0x20] sm:$0xff]
    %v234 = vld [vmem:[%s228 + $0x28] sm:$0xff]
    %v235 = vld [vmem:[%s228 + $0x30] sm:$0xff]
    %v236 = vld [vmem:[%s228 + $0x38] sm:$0xff]
    %v237 = vld [vmem:[%s228 + $0x40] sm:$0xff]
    %v238 = vld [vmem:[%s228 + $0x48] sm:$0xff]
    %v239 = vld [vmem:[%s228 + $0x50] sm:$0xff]
    %v240 = vld [vmem:[%s228 + $0x58] sm:$0xff]
    %v241 = vld [vmem:[%s228 + $0x60] sm:$0xff]
    %v242 = vld [vmem:[%s228 + $0x68] sm:$0xff]
    %v243 = vld [vmem:[%s228 + $0x70] sm:$0xff]
    %v244 = vld [vmem:[%s228 + $0x78] sm:$0xff]
    %vm250 = vcmask 1046528
    %v251 = vrot.slane %v84, 1
    %v252 = vrot.slane %v85, 1
    %v253 = vsel %vm250, %v251, %v252
    %v254 = vrot.slane %v86, 1
    %v255 = vsel %vm250, %v252, %v254
    %v256 = vrot.slane %v87, 1
    %v257 = vsel %vm250, %v254, %v256
    %v258 = vrot.slane 0.0, 1
    %v259 = vsel %vm250, %v256, %v258
    %264 = vmatpush.msra.mxu0 %v244
    %265 = vmatpush.msra.mxu0 %v243
    %266 = vmatpush.msra.mxu0 %v242
    %267 = vmatpush.msra.mxu0 %v241
    %268 = vmatpush.msra.mxu0 %v240
    %269 = vmatpush.msra.mxu0 %v239
    %270 = vmatpush.msra.mxu0 %v238
    %271 = vmatpush.msra.mxu0 %v237
    %272 = vmatpush.msra.mxu0 %v236
    %273 = vmatpush.msra.mxu0 %v235
    %274 = vmatpush.msra.mxu0 %v234
    %275 = vmatpush.msra.mxu0 %v233
    %276 = vmatpush.msra.mxu0 %v232
    %277 = vmatpush.msra.mxu0 %v231
    %278 = vmatpush.msra.mxu0 %v230
    %279 = vmatpush.msra.mxu0 %v229
    %280 = vmatmul.f32.gmra.mxu0 %v253
    %v281 = vpop.f32.mrf.mxu0
    %v282 = vadd.f32 0.0, %v281
    %283 = vmatmul.f32.gmra.mxu0 %v255
    %v284 = vpop.f32.mrf.mxu0
    %v285 = vadd.f32 0.0, %v284
    %286 = vmatmul.f32.gmra.mxu0 %v257
    %v287 = vpop.f32.mrf.mxu0
    %v288 = vadd.f32 0.0, %v287
    %289 = vmatmul.f32.gmra.mxu0 %v259
    %v290 = vpop.f32.mrf.mxu0
    %v291 = vadd.f32 0.0, %v290
    %292 = vdwg.mxu0
    %293 = vmatpush.msra.mxu0 %v227
    %294 = vmatpush.msra.mxu0 %v226
    %295 = vmatpush.msra.mxu0 %v225
    %296 = vmatpush.msra.mxu0 %v224
    %297 = vmatpush.msra.mxu0 %v223
    %298 = vmatpush.msra.mxu0 %v222
    %299 = vmatpush.msra.mxu0 %v221
    %300 = vmatpush.msra.mxu0 %v220
    %301 = vmatpush.msra.mxu0 %v219
    %302 = vmatpush.msra.mxu0 %v218
    %303 = vmatpush.msra.mxu0 %v217
    %304 = vmatpush.msra.mxu0 %v216
    %305 = vmatpush.msra.mxu0 %v215
    %306 = vmatpush.msra.mxu0 %v214
    %307 = vmatpush.msra.mxu0 %v213
    %308 = vmatpush.msra.mxu0 %v212
    %309 = vmatmul.f32.gmra.mxu0 %v84
    %v310 = vpop.f32.mrf.mxu0
    %v311 = vadd.f32 %v282, %v310
    %312 = vmatmul.f32.gmra.mxu0 %v85
    %v313 = vpop.f32.mrf.mxu0
    %v314 = vadd.f32 %v285, %v313
    %315 = vmatmul.f32.gmra.mxu0 %v86
    %v316 = vpop.f32.mrf.mxu0
    %v317 = vadd.f32 %v288, %v316
    %318 = vmatmul.f32.gmra.mxu0 %v87
    %v319 = vpop.f32.mrf.mxu0
    %v320 = vadd.f32 %v291, %v319
    %321 = vdwg.mxu0
    %v326 = vrot.slane %v311, 4
    %v327 = vrot.slane %v314, 4
    %v328 = vrot.slane %v317, 4
    %v329 = vrot.slane %v320, 4
    %s334 = scalar_lea.vmem [#allocation8], 4
    %v335 = vld [vmem:[%s334] sm:$0xf]
    %v336 = vadd.f32 %v311, %v335
    %v337 = vadd.f32 %v326, %v335
    %v338 = vadd.f32 %v314, %v335
    %v339 = vadd.f32 %v327, %v335
    %v340 = vadd.f32 %v317, %v335
    %v341 = vadd.f32 %v328, %v335
    %v342 = vadd.f32 %v320, %v335
    %v343 = vadd.f32 %v329, %v335
    %v344 = vsel %vm154, %v336, -inf
    %v345 = vrot.slane %v344, 4
    %v346 = vmax.f32 %v344, %v345
    %v347 = vrot.slane %v346, 2
    %v348 = vmax.f32 %v346, %v347
    %v349 = vrot.slane %v348, 1
    %v350 = vmax.f32 %v348, %v349
    %v351 = vsel %vm154, %v337, -inf
    %v352 = vrot.slane %v351, 4
    %v353 = vmax.f32 %v351, %v352
    %v354 = vrot.slane %v353, 2
    %v355 = vmax.f32 %v353, %v354
    %v356 = vrot.slane %v355, 1
    %v357 = vmax.f32 %v355, %v356
    %v358 = vsel %vm154, %v338, -inf
    %v359 = vrot.slane %v358, 4
    %v360 = vmax.f32 %v358, %v359
    %v361 = vrot.slane %v360, 2
    %v362 = vmax.f32 %v360, %v361
    %v363 = vrot.slane %v362, 1
    %v364 = vmax.f32 %v362, %v363
    %v365 = vsel %vm154, %v339, -inf
    %v366 = vrot.slane %v365, 4
    %v367 = vmax.f32 %v365, %v366
    %v368 = vrot.slane %v367, 2
    %v369 = vmax.f32 %v367, %v368
    %v370 = vrot.slane %v369, 1
    %v371 = vmax.f32 %v369, %v370
    %v372 = vsel %vm154, %v340, -inf
    %v373 = vrot.slane %v372, 4
    %v374 = vmax.f32 %v372, %v373
    %v375 = vrot.slane %v374, 2
    %v376 = vmax.f32 %v374, %v375
    %v377 = vrot.slane %v376, 1
    %v378 = vmax.f32 %v376, %v377
    %v379 = vsel %vm154, %v341, -inf
    %v380 = vrot.slane %v379, 4
    %v381 = vmax.f32 %v379, %v380
    %v382 = vrot.slane %v381, 2
    %v383 = vmax.f32 %v381, %v382
    %v384 = vrot.slane %v383, 1
    %v385 = vmax.f32 %v383, %v384
    %v386 = vsel %vm154, %v342, -inf
    %v387 = vrot.slane %v386, 4
    %v388 = vmax.f32 %v386, %v387
    %v389 = vrot.slane %v388, 2
    %v390 = vmax.f32 %v388, %v389
    %v391 = vrot.slane %v390, 1
    %v392 = vmax.f32 %v390, %v391
    %v393 = vsel %vm154, %v343, -inf
    %v394 = vrot.slane %v393, 4
    %v395 = vmax.f32 %v393, %v394
    %v396 = vrot.slane %v395, 2
    %v397 = vmax.f32 %v395, %v396
    %v398 = vrot.slane %v397, 1
    %v399 = vmax.f32 %v397, %v398
    %v400 = vmax.f32 %v161, %v350
    %v401 = vmax.f32 %v168, %v357
    %v402 = vmax.f32 %v175, %v364
    %v403 = vmax.f32 %v182, %v371
    %v404 = vmax.f32 %v189, %v378
    %v405 = vmax.f32 %v196, %v385
    %v406 = vmax.f32 %v203, %v392
    %v407 = vmax.f32 %v210, %v399
    %s408 = scalar_lea.vmem [#allocation5], 256
    %v409 = vld [vmem:[%s408] sm:$0xff]
    %v410 = vld [vmem:[%s408 + $0x8] sm:$0xff]
    %v411 = vld [vmem:[%s408 + $0x10] sm:$0xff]
    %v412 = vld [vmem:[%s408 + $0x18] sm:$0xff]
    %v413 = vld [vmem:[%s408 + $0x20] sm:$0xff]
    %v414 = vld [vmem:[%s408 + $0x28] sm:$0xff]
    %v415 = vld [vmem:[%s408 + $0x30] sm:$0xff]
    %v416 = vld [vmem:[%s408 + $0x38] sm:$0xff]
    %v417 = vld [vmem:[%s408 + $0x40] sm:$0xff]
    %v418 = vld [vmem:[%s408 + $0x48] sm:$0xff]
    %v419 = vld [vmem:[%s408 + $0x50] sm:$0xff]
    %v420 = vld [vmem:[%s408 + $0x58] sm:$0xff]
    %v421 = vld [vmem:[%s408 + $0x60] sm:$0xff]
    %v422 = vld [vmem:[%s408 + $0x68] sm:$0xff]
    %v423 = vld [vmem:[%s408 + $0x70] sm:$0xff]
    %v424 = vld [vmem:[%s408 + $0x78] sm:$0xff]
    %s425 = scalar_lea.vmem [#allocation7], 256
    %v426 = vld [vmem:[%s425] sm:$0xff]
    %v427 = vld [vmem:[%s425 + $0x8] sm:$0xff]
    %v428 = vld [vmem:[%s425 + $0x10] sm:$0xff]
    %v429 = vld [vmem:[%s425 + $0x18] sm:$0xff]
    %v430 = vld [vmem:[%s425 + $0x20] sm:$0xff]
    %v431 = vld [vmem:[%s425 + $0x28] sm:$0xff]
    %v432 = vld [vmem:[%s425 + $0x30] sm:$0xff]
    %v433 = vld [vmem:[%s425 + $0x38] sm:$0xff]
    %v434 = vld [vmem:[%s425 + $0x40] sm:$0xff]
    %v435 = vld [vmem:[%s425 + $0x48] sm:$0xff]
    %v436 = vld [vmem:[%s425 + $0x50] sm:$0xff]
    %v437 = vld [vmem:[%s425 + $0x58] sm:$0xff]
    %v438 = vld [vmem:[%s425 + $0x60] sm:$0xff]
    %v439 = vld [vmem:[%s425 + $0x68] sm:$0xff]
    %v440 = vld [vmem:[%s425 + $0x70] sm:$0xff]
    %v441 = vld [vmem:[%s425 + $0x78] sm:$0xff]
    %442 = vmatpush.msra.mxu0 %v441
    %443 = vmatpush.msra.mxu0 %v440
    %444 = vmatpush.msra.mxu0 %v439
    %445 = vmatpush.msra.mxu0 %v438
    %446 = vmatpush.msra.mxu0 %v437
    %447 = vmatpush.msra.mxu0 %v436
    %448 = vmatpush.msra.mxu0 %v435
    %449 = vmatpush.msra.mxu0 %v434
    %450 = vmatpush.msra.mxu0 %v433
    %451 = vmatpush.msra.mxu0 %v432
    %452 = vmatpush.msra.mxu0 %v431
    %453 = vmatpush.msra.mxu0 %v430
    %454 = vmatpush.msra.mxu0 %v429
    %455 = vmatpush.msra.mxu0 %v428
    %456 = vmatpush.msra.mxu0 %v427
    %457 = vmatpush.msra.mxu0 %v426
    %458 = vmatmul.f32.gmra.mxu0 %v253
    %v459 = vpop.f32.mrf.mxu0
    %v460 = vadd.f32 0.0, %v459
    %461 = vmatmul.f32.gmra.mxu0 %v255
    %v462 = vpop.f32.mrf.mxu0
    %v463 = vadd.f32 0.0, %v462
    %464 = vmatmul.f32.gmra.mxu0 %v257
    %v465 = vpop.f32.mrf.mxu0
    %v466 = vadd.f32 0.0, %v465
    %467 = vmatmul.f32.gmra.mxu0 %v259
    %v468 = vpop.f32.mrf.mxu0
    %v469 = vadd.f32 0.0, %v468
    %470 = vdwg.mxu0
    %471 = vmatpush.msra.mxu0 %v424
    %472 = vmatpush.msra.mxu0 %v423
    %473 = vmatpush.msra.mxu0 %v422
    %474 = vmatpush.msra.mxu0 %v421
    %475 = vmatpush.msra.mxu0 %v420
    %476 = vmatpush.msra.mxu0 %v419
    %477 = vmatpush.msra.mxu0 %v418
    %478 = vmatpush.msra.mxu0 %v417
    %479 = vmatpush.msra.mxu0 %v416
    %480 = vmatpush.msra.mxu0 %v415
    %481 = vmatpush.msra.mxu0 %v414
    %482 = vmatpush.msra.mxu0 %v413
    %483 = vmatpush.msra.mxu0 %v412
    %484 = vmatpush.msra.mxu0 %v411
    %485 = vmatpush.msra.mxu0 %v410
    %486 = vmatpush.msra.mxu0 %v409
    %487 = vmatmul.f32.gmra.mxu0 %v84
    %v488 = vpop.f32.mrf.mxu0
    %v489 = vadd.f32 %v460, %v488
    %490 = vmatmul.f32.gmra.mxu0 %v85
    %v491 = vpop.f32.mrf.mxu0
    %v492 = vadd.f32 %v463, %v491
    %493 = vmatmul.f32.gmra.mxu0 %v86
    %v494 = vpop.f32.mrf.mxu0
    %v495 = vadd.f32 %v466, %v494
    %496 = vmatmul.f32.gmra.mxu0 %v87
    %v497 = vpop.f32.mrf.mxu0
    %v498 = vadd.f32 %v469, %v497
    %499 = vdwg.mxu0
    %v504 = vrot.slane %v489, 4
    %v505 = vrot.slane %v492, 4
    %v506 = vrot.slane %v495, 4
    %v507 = vrot.slane %v498, 4
    %s512 = scalar_lea.vmem [#allocation8], 8
    %v513 = vld [vmem:[%s512] sm:$0xf]
    %v514 = vadd.f32 %v489, %v513
    %v515 = vadd.f32 %v504, %v513
    %v516 = vadd.f32 %v492, %v513
    %v517 = vadd.f32 %v505, %v513
    %v518 = vadd.f32 %v495, %v513
    %v519 = vadd.f32 %v506, %v513
    %v520 = vadd.f32 %v498, %v513
    %v521 = vadd.f32 %v507, %v513
    %v522 = vsel %vm154, %v514, -inf
    %v523 = vrot.slane %v522, 4
    %v524 = vmax.f32 %v522, %v523
    %v525 = vrot.slane %v524, 2
    %v526 = vmax.f32 %v524, %v525
    %v527 = vrot.slane %v526, 1
    %v528 = vmax.f32 %v526, %v527
    %v529 = vsel %vm154, %v515, -inf
    %v530 = vrot.slane %v529, 4
    %v531 = vmax.f32 %v529, %v530
    %v532 = vrot.slane %v531, 2
    %v533 = vmax.f32 %v531, %v532
    %v534 = vrot.slane %v533, 1
    %v535 = vmax.f32 %v533, %v534
    %v536 = vsel %vm154, %v516, -inf
    %v537 = vrot.slane %v536, 4
    %v538 = vmax.f32 %v536, %v537
    %v539 = vrot.slane %v538, 2
    %v540 = vmax.f32 %v538, %v539
    %v541 = vrot.slane %v540, 1
    %v542 = vmax.f32 %v540, %v541
    %v543 = vsel %vm154, %v517, -inf
    %v544 = vrot.slane %v543, 4
    %v545 = vmax.f32 %v543, %v544
    %v546 = vrot.slane %v545, 2
    %v547 = vmax.f32 %v545, %v546
    %v548 = vrot.slane %v547, 1
    %v549 = vmax.f32 %v547, %v548
    %v550 = vsel %vm154, %v518, -inf
    %v551 = vrot.slane %v550, 4
    %v552 = vmax.f32 %v550, %v551
    %v553 = vrot.slane %v552, 2
    %v554 = vmax.f32 %v552, %v553
    %v555 = vrot.slane %v554, 1
    %v556 = vmax.f32 %v554, %v555
    %v557 = vsel %vm154, %v519, -inf
    %v558 = vrot.slane %v557, 4
    %v559 = vmax.f32 %v557, %v558
    %v560 = vrot.slane %v559, 2
    %v561 = vmax.f32 %v559, %v560
    %v562 = vrot.slane %v561, 1
    %v563 = vmax.f32 %v561, %v562
    %v564 = vsel %vm154, %v520, -inf
    %v565 = vrot.slane %v564, 4
    %v566 = vmax.f32 %v564, %v565
    %v567 = vrot.slane %v566, 2
    %v568 = vmax.f32 %v566, %v567
    %v569 = vrot.slane %v568, 1
    %v570 = vmax.f32 %v568, %v569
    %v571 = vsel %vm154, %v521, -inf
    %v572 = vrot.slane %v571, 4
    %v573 = vmax.f32 %v571, %v572
    %v574 = vrot.slane %v573, 2
    %v575 = vmax.f32 %v573, %v574
    %v576 = vrot.slane %v575, 1
    %v577 = vmax.f32 %v575, %v576
    %v578 = vmax.f32 %v400, %v528
    %v579 = vmax.f32 %v401, %v535
    %v580 = vmax.f32 %v402, %v542
    %v581 = vmax.f32 %v403, %v549
    %v582 = vmax.f32 %v404, %v556
    %v583 = vmax.f32 %v405, %v563
    %v584 = vmax.f32 %v406, %v570
    %v585 = vmax.f32 %v407, %v577
    %s586 = scalar_lea.vmem [#allocation5], 384
    %v587 = vld [vmem:[%s586] sm:$0xff]
    %v588 = vld [vmem:[%s586 + $0x8] sm:$0xff]
    %v589 = vld [vmem:[%s586 + $0x10] sm:$0xff]
    %v590 = vld [vmem:[%s586 + $0x18] sm:$0xff]
    %v591 = vld [vmem:[%s586 + $0x20] sm:$0xff]
    %v592 = vld [vmem:[%s586 + $0x28] sm:$0xff]
    %v593 = vld [vmem:[%s586 + $0x30] sm:$0xff]
    %v594 = vld [vmem:[%s586 + $0x38] sm:$0xff]
    %v595 = vld [vmem:[%s586 + $0x40] sm:$0xff]
    %v596 = vld [vmem:[%s586 + $0x48] sm:$0xff]
    %v597 = vld [vmem:[%s586 + $0x50] sm:$0xff]
    %v598 = vld [vmem:[%s586 + $0x58] sm:$0xff]
    %v599 = vld [vmem:[%s586 + $0x60] sm:$0xff]
    %v600 = vld [vmem:[%s586 + $0x68] sm:$0xff]
    %v601 = vld [vmem:[%s586 + $0x70] sm:$0xff]
    %v602 = vld [vmem:[%s586 + $0x78] sm:$0xff]
    %s603 = scalar_lea.vmem [#allocation7], 384
    %v604 = vld [vmem:[%s603] sm:$0xff]
    %v605 = vld [vmem:[%s603 + $0x8] sm:$0xff]
    %v606 = vld [vmem:[%s603 + $0x10] sm:$0xff]
    %v607 = vld [vmem:[%s603 + $0x18] sm:$0xff]
    %v608 = vld [vmem:[%s603 + $0x20] sm:$0xff]
    %v609 = vld [vmem:[%s603 + $0x28] sm:$0xff]
    %v610 = vld [vmem:[%s603 + $0x30] sm:$0xff]
    %v611 = vld [vmem:[%s603 + $0x38] sm:$0xff]
    %v612 = vld [vmem:[%s603 + $0x40] sm:$0xff]
    %v613 = vld [vmem:[%s603 + $0x48] sm:$0xff]
    %v614 = vld [vmem:[%s603 + $0x50] sm:$0xff]
    %v615 = vld [vmem:[%s603 + $0x58] sm:$0xff]
    %v616 = vld [vmem:[%s603 + $0x60] sm:$0xff]
    %v617 = vld [vmem:[%s603 + $0x68] sm:$0xff]
    %v618 = vld [vmem:[%s603 + $0x70] sm:$0xff]
    %v619 = vld [vmem:[%s603 + $0x78] sm:$0xff]
    %620 = vmatpush.msra.mxu0 %v619
    %621 = vmatpush.msra.mxu0 %v618
    %622 = vmatpush.msra.mxu0 %v617
    %623 = vmatpush.msra.mxu0 %v616
    %624 = vmatpush.msra.mxu0 %v615
    %625 = vmatpush.msra.mxu0 %v614
    %626 = vmatpush.msra.mxu0 %v613
    %627 = vmatpush.msra.mxu0 %v612
    %628 = vmatpush.msra.mxu0 %v611
    %629 = vmatpush.msra.mxu0 %v610
    %630 = vmatpush.msra.mxu0 %v609
    %631 = vmatpush.msra.mxu0 %v608
    %632 = vmatpush.msra.mxu0 %v607
    %633 = vmatpush.msra.mxu0 %v606
    %634 = vmatpush.msra.mxu0 %v605
    %635 = vmatpush.msra.mxu0 %v604
    %636 = vmatmul.f32.gmra.mxu0 %v253
    %v637 = vpop.f32.mrf.mxu0
    %v638 = vadd.f32 0.0, %v637
    %639 = vmatmul.f32.gmra.mxu0 %v255
    %v640 = vpop.f32.mrf.mxu0
    %v641 = vadd.f32 0.0, %v640
    %642 = vmatmul.f32.gmra.mxu0 %v257
    %v643 = vpop.f32.mrf.mxu0
    %v644 = vadd.f32 0.0, %v643
    %645 = vmatmul.f32.gmra.mxu0 %v259
    %v646 = vpop.f32.mrf.mxu0
    %v647 = vadd.f32 0.0, %v646
    %648 = vdwg.mxu0
    %649 = vmatpush.msra.mxu0 %v602
    %650 = vmatpush.msra.mxu0 %v601
    %651 = vmatpush.msra.mxu0 %v600
    %652 = vmatpush.msra.mxu0 %v599
    %653 = vmatpush.msra.mxu0 %v598
    %654 = vmatpush.msra.mxu0 %v597
    %655 = vmatpush.msra.mxu0 %v596
    %656 = vmatpush.msra.mxu0 %v595
    %657 = vmatpush.msra.mxu0 %v594
    %658 = vmatpush.msra.mxu0 %v593
    %659 = vmatpush.msra.mxu0 %v592
    %660 = vmatpush.msra.mxu0 %v591
    %661 = vmatpush.msra.mxu0 %v590
    %662 = vmatpush.msra.mxu0 %v589
    %663 = vmatpush.msra.mxu0 %v588
    %664 = vmatpush.msra.mxu0 %v587
    %665 = vmatmul.f32.gmra.mxu0 %v84
    %v666 = vpop.f32.mrf.mxu0
    %v667 = vadd.f32 %v638, %v666
    %668 = vmatmul.f32.gmra.mxu0 %v85
    %v669 = vpop.f32.mrf.mxu0
    %v670 = vadd.f32 %v641, %v669
    %671 = vmatmul.f32.gmra.mxu0 %v86
    %v672 = vpop.f32.mrf.mxu0
    %v673 = vadd.f32 %v644, %v672
    %674 = vmatmul.f32.gmra.mxu0 %v87
    %v675 = vpop.f32.mrf.mxu0
    %v676 = vadd.f32 %v647, %v675
    %677 = vdwg.mxu0
    %v682 = vrot.slane %v667, 4
    %v683 = vrot.slane %v670, 4
    %v684 = vrot.slane %v673, 4
    %v685 = vrot.slane %v676, 4
    %s690 = scalar_lea.vmem [#allocation8], 12
    %v691 = vld [vmem:[%s690] sm:$0xf]
    %v692 = vadd.f32 %v667, %v691
    %v693 = vadd.f32 %v682, %v691
    %v694 = vadd.f32 %v670, %v691
    %v695 = vadd.f32 %v683, %v691
    %v696 = vadd.f32 %v673, %v691
    %v697 = vadd.f32 %v684, %v691
    %v698 = vadd.f32 %v676, %v691
    %v699 = vadd.f32 %v685, %v691
    %v700 = vsel %vm154, %v692, -inf
    %v701 = vrot.slane %v700, 4
    %v702 = vmax.f32 %v700, %v701
    %v703 = vrot.slane %v702, 2
    %v704 = vmax.f32 %v702, %v703
    %v705 = vrot.slane %v704, 1
    %v706 = vmax.f32 %v704, %v705
    %v707 = vsel %vm154, %v693, -inf
    %v708 = vrot.slane %v707, 4
    %v709 = vmax.f32 %v707, %v708
    %v710 = vrot.slane %v709, 2
    %v711 = vmax.f32 %v709, %v710
    %v712 = vrot.slane %v711, 1
    %v713 = vmax.f32 %v711, %v712
    %v714 = vsel %vm154, %v694, -inf
    %v715 = vrot.slane %v714, 4
    %v716 = vmax.f32 %v714, %v715
    %v717 = vrot.slane %v716, 2
    %v718 = vmax.f32 %v716, %v717
    %v719 = vrot.slane %v718, 1
    %v720 = vmax.f32 %v718, %v719
    %v721 = vsel %vm154, %v695, -inf
    %v722 = vrot.slane %v721, 4
    %v723 = vmax.f32 %v721, %v722
    %v724 = vrot.slane %v723, 2
    %v725 = vmax.f32 %v723, %v724
    %v726 = vrot.slane %v725, 1
    %v727 = vmax.f32 %v725, %v726
    %v728 = vsel %vm154, %v696, -inf
    %v729 = vrot.slane %v728, 4
    %v730 = vmax.f32 %v728, %v729
    %v731 = vrot.slane %v730, 2
    %v732 = vmax.f32 %v730, %v731
    %v733 = vrot.slane %v732, 1
    %v734 = vmax.f32 %v732, %v733
    %v735 = vsel %vm154, %v697, -inf
    %v736 = vrot.slane %v735, 4
    %v737 = vmax.f32 %v735, %v736
    %v738 = vrot.slane %v737, 2
    %v739 = vmax.f32 %v737, %v738
    %v740 = vrot.slane %v739, 1
    %v741 = vmax.f32 %v739, %v740
    %v742 = vsel %vm154, %v698, -inf
    %v743 = vrot.slane %v742, 4
    %v744 = vmax.f32 %v742, %v743
    %v745 = vrot.slane %v744, 2
    %v746 = vmax.f32 %v744, %v745
    %v747 = vrot.slane %v746, 1
    %v748 = vmax.f32 %v746, %v747
    %v749 = vsel %vm154, %v699, -inf
    %v750 = vrot.slane %v749, 4
    %v751 = vmax.f32 %v749, %v750
    %v752 = vrot.slane %v751, 2
    %v753 = vmax.f32 %v751, %v752
    %v754 = vrot.slane %v753, 1
    %v755 = vmax.f32 %v753, %v754
    %v756 = vmax.f32 %v578, %v706
    %v757 = vmax.f32 %v579, %v713
    %v758 = vmax.f32 %v580, %v720
    %v759 = vmax.f32 %v581, %v727
    %v760 = vmax.f32 %v582, %v734
    %v761 = vmax.f32 %v583, %v741
    %v762 = vmax.f32 %v584, %v748
    %v763 = vmax.f32 %v585, %v755
    %v764 = vld [vmem:[%s4] sm:$0x1]
    %v766 = vperm.slane %v764, 0
    %v768 = vadd.f32 %v756, %v766
    %v769 = vadd.f32 %v757, %v766
    %v770 = vadd.f32 %v758, %v766
    %v771 = vadd.f32 %v759, %v766
    %v772 = vadd.f32 %v760, %v766
    %v773 = vadd.f32 %v761, %v766
    %v774 = vadd.f32 %v762, %v766
    %v775 = vadd.f32 %v763, %v766
    %v776 = vmax.f32 %v768, 0.0
    %v777 = vmax.f32 %v769, 0.0
    %v778 = vmax.f32 %v770, 0.0
    %v779 = vmax.f32 %v771, 0.0
    %v780 = vmax.f32 %v772, 0.0
    %v781 = vmax.f32 %v773, 0.0
    %v782 = vmax.f32 %v774, 0.0
    %v783 = vmax.f32 %v775, 0.0
    %v792 = vrot.slane %v777, 7
    %vm793 = vcmask 1041409
    %v794 = vsel %vm793, %v792, %v776
    %v795 = vrot.slane %v778, 6
    %vm796 = vcmask 1042434
    %v797 = vsel %vm796, %v795, %v794
    %v798 = vrot.slane %v779, 5
    %vm799 = vcmask 1043459
    %v800 = vsel %vm799, %v798, %v797
    %v801 = vrot.slane %v780, 4
    %vm802 = vcmask 1044484
    %v803 = vsel %vm802, %v801, %v800
    %v804 = vrot.slane %v781, 3
    %vm805 = vcmask 1045509
    %v806 = vsel %vm805, %v804, %v803
    %v807 = vrot.slane %v782, 2
    %vm808 = vcmask 1046534
    %v809 = vsel %vm808, %v807, %v806
    %v810 = vrot.slane %v783, 1
    %vm811 = vcmask 1047559
    %v812 = vsel %vm811, %v810, %v809
    %814 = vst [vmem:[#allocation10] sm:$0xff] %v812
    // Predicated region
    $region38: #{tpu_custom_call.1} parent=1 // pred_check
      _
    $region39: #{tpu_custom_call.1} parent=1 // pred_check_branch
      %816 = sbr.rel (0) target = $region41
    $region40: #{tpu_custom_call.1} parent=1 // pred_region
      %818 = vsyncadd [#allocation4], 0
      %s820 = sshll.u32 [#allocation10], 4
      %s821 = int_to_ptr.vmem [resolvable:$true] %s820
      %s822 = sshll.u32 %s5, 4
      %s823 = int_to_ptr.hbm [resolvable:$true] %s822
      %825 = dma.vmem_to_hbm [thread:$0]  %s821, 128, %s823, [#allocation4]
    $region41: #{tpu_custom_call.1} parent=1 // pred_fallthru
      _
    // Predicated region
    $region42: #{tpu_custom_call.1} parent=1 // pred_check
      _
    $region43: #{tpu_custom_call.1} parent=1 // pred_check_branch
      %827 = sbr.rel (0) target = $region45
    $region44: #{tpu_custom_call.1} parent=1 // pred_region
      %829 = dma.done [#allocation4], 128
    $region45: #{tpu_custom_call.1} parent=1 // pred_fallthru
      _
    %830 = vsyncpa [#allocation3], 1
    %831 = vsyncpa [#allocation6], 1
    %832 = vsyncpa [#allocation9], 1
    %833 = vsyncpa [#allocation4], 1

</llo_original>
